<compile_context>
chip_gen: v6e
topology: v6e:2x2x1
jax: 0.10.0
libtpu: 0.0.40
codegen_flags: <defaults>
</compile_context>

<pallas_src>
import functools

import jax
import jax.numpy as jnp
from jax.experimental import pallas as pl
from jax.experimental.pallas import tpu as pltpu

BN_EPS = 1e-5
_DEFAULT_MAX_TB = 4096   # lane-dense batch tile (multiple of 128)


def _vmem_limit_bytes():
    """Scoped-VMEM request scaled to the chip, with headroom."""
    cap = 64 * 1024 * 1024
    try:
        cap = int(pltpu.get_tpu_info().vmem_capacity_bytes)
    except Exception:
        pass  # conservative default works on all chips
    return max(32 * 1024 * 1024, min((cap * 3) // 4, 96 * 1024 * 1024))


def _choose_tiling(B, max_tb):
    """Return (TB, B_pad): full-batch single tile when it fits, otherwise a
    lane-aligned (multiple-of-128) tile; pad B when no exact divisor exists.
    Zero-padded rows are exactly BN-neutral because b1 is dropped (h == 0)."""
    if B <= max_tb:
        return B, B
    for tb in range(max_tb, 127, -128):
        if B % tb == 0:
            return tb, B
    tb = max_tb
    return tb, ((B + tb - 1) // tb) * tb


def _bn_prelu(h, sum_h, sq_h, p, inv_n):
    """h: (H, TB) batch-on-lanes.  Returns PReLU(BatchNorm(h)), same layout."""
    H = h.shape[0]
    mean = sum_h * inv_n                       # (H, 1)
    # Biased variance (training-mode BatchNorm).  E[h^2]-mean^2 is the
    # cancellation-prone form; fine at these scales (see review note).
    var = sq_h * inv_n - mean * mean
    gamma, beta, alpha = p[:H, 0:1], p[:H, 1:2], p[:H, 2:3]
    scale = gamma * jax.lax.rsqrt(var + BN_EPS)
    shift = beta - mean * scale
    h_bn = h * scale + shift
    return jnp.where(h_bn > 0, h_bn, alpha * h_bn)


def _mlp_single_kernel(x_ref, w1t_ref, w2t_ref, pp_ref, ot_ref, *, inv_n):
    """Fast path: whole batch in one step.  x read from HBM exactly once."""
    x = x_ref[...].astype(jnp.float32)                               # (B, F)
    # Linear-1, batch-on-lanes.  b1 omitted: batch-mean subtraction cancels it.
    h = jax.lax.dot_general(w1t_ref[...], x, (((1,), (1,)), ((), ())),
                            preferred_element_type=jnp.float32)      # (H, B)
    s = jnp.sum(h, axis=1, keepdims=True)                            # (H, 1)
    sq = jnp.sum(h * h, axis=1, keepdims=True)                       # (H, 1)
    p = pp_ref[...]
    h_act = _bn_prelu(h, s, sq, p, inv_n)                            # (H, B)
    out_f = ot_ref.shape[0]
    out_t = jax.lax.dot_general(w2t_ref[...], h_act, (((1,), (0,)), ((), ())),
                                preferred_element_type=jnp.float32)  # (out_f, B)
    ot_ref[...] = (out_t + p[:out_f, 3:4]).astype(ot_ref.dtype)


def _mlp_tiled_kernel(x_ref, w1t_ref, w2t_ref, pp_ref, ot_ref,
                      sum_ref, sq_ref, hcache_ref, *, inv_n, tb, cache_h):
    """Two-phase global BatchNorm over batch tiles.

    Phase 0: stream x tiles, accumulate sum(h)/sum(h*h), cache h^T in VMEM.
    Phase 1: read h from the cache (or recompute if cache disabled),
             normalize + PReLU + Linear-2, store the lane-dense (out_f, TB).
    """
    phase = pl.program_id(0)
    tile = pl.program_id(1)

    @pl.when(jnp.logical_and(phase == 0, tile == 0))
    def _init():
        sum_ref[...] = jnp.zeros_like(sum_ref)
        sq_ref[...] = jnp.zeros_like(sq_ref)
        ot_ref[...] = jnp.zeros_like(ot_ref)   # insurance vs. a stray writeback

    @pl.when(phase == 0)
    def _stats():
        x = x_ref[...].astype(jnp.float32)                           # (TB, F)
        h = jax.lax.dot_general(w1t_ref[...], x, (((1,), (1,)), ((), ())),
                                preferred_element_type=jnp.float32)  # (H, TB)
        sum_ref[...] += jnp.sum(h, axis=1, keepdims=True)
        sq_ref[...] += jnp.sum(h * h, axis=1, keepdims=True)
        if cache_h:
            start = pl.multiple_of(tile * tb, 128)
            hcache_ref[:, pl.ds(start, tb)] = h

    @pl.when(phase == 1)
    def _normalize_project():
        if cache_h:
            start = pl.multiple_of(tile * tb, 128)
            h = hcache_ref[:, pl.ds(start, tb)]                      # (H, TB)
        else:
            x = x_ref[...].astype(jnp.float32)
            h = jax.lax.dot_general(w1t_ref[...], x, (((1,), (1,)), ((), ())),
                                    preferred_element_type=jnp.float32)
        p = pp_ref[...]
        h_act = _bn_prelu(h, sum_ref[...], sq_ref[...], p, inv_n)
        out_f = ot_ref.shape[0]
        out_t = jax.lax.dot_general(w2t_ref[...], h_act, (((1,), (0,)), ((), ())),
                                    preferred_element_type=jnp.float32)
        ot_ref[...] = (out_t + p[:out_f, 3:4]).astype(ot_ref.dtype)


def mlp_8_bn_prl_forward(image, tabular, params, *, max_tb=_DEFAULT_MAX_TB,
                         force_no_cache=False):
    """Pallas implementation of MLP_8_bn_prl.forward((image, tabular))."""
    del image  # unused by the PyTorch module's forward
    w1, gamma, beta, alpha, w2, b2 = (
        params["w1"], params["gamma"], params["beta"],
        params["alpha"], params["w2"], params["b2"],
    )
    B, F = tabular.shape
    H = w1.shape[1]
    out_f = w2.shape[1]

    # Pre-transposed weights (tiny) for the batch-on-lanes datapath.
    w1t = w1.T.astype(jnp.float32)            # (H, F)
    w2t = w2.T.astype(jnp.float32)            # (out_f, H)

    # Pack the per-channel params into one small (R, 4) block:
    #   col 0 gamma, col 1 beta, col 2 PReLU alpha (broadcast), col 3 L2 bias.
    R = max(H, out_f)
    packed = jnp.zeros((R, 4), jnp.float32)
    packed = packed.at[:H, 0].set(gamma.reshape(-1).astype(jnp.float32))
    packed = packed.at[:H, 1].set(beta.reshape(-1).astype(jnp.float32))
    packed = packed.at[:H, 2].set(
        jnp.full((H,), alpha.reshape(()).astype(jnp.float32)))
    packed = packed.at[:out_f, 3].set(b2.reshape(-1).astype(jnp.float32))

    vmem_limit = _vmem_limit_bytes()
    inv_n = 1.0 / B                           # true batch; pad rows are BN-neutral
    TB, B_pad = _choose_tiling(B, max_tb)
    n_tiles = B_pad // TB

    flops = 2 * B_pad * F * H + 2 * B_pad * H * out_f
    bytes_small = 4 * (B_pad * out_f + F * H + out_f * H + R * 4)
    cost = pl.CostEstimate(flops=int(flops), transcendentals=int(H),
                           bytes_accessed=int(4 * B_pad * F + bytes_small))

    if n_tiles == 1:
        # Launch-bound regime: one grid step, no phase axis.
        out_t = pl.pallas_call(
            functools.partial(_mlp_single_kernel, inv_n=inv_n),
            out_shape=jax.ShapeDtypeStruct((out_f, B), jnp.float32),
            compiler_params=pltpu.CompilerParams(vmem_limit_bytes=vmem_limit),
            cost_estimate=cost,
        )(tabular, w1t, w2t, packed)
        return out_t.T   # (B, out_f)

    # -------- Multi-tile path: two-phase global BatchNorm --------
    if B_pad > B:
        # Zero rows contribute exactly 0 to both BN sums (b1 is dropped), so
        # padding is numerics-neutral; padded output rows are sliced off below.
        tabular = jnp.pad(tabular, ((0, B_pad - B), (0, 0)))

    # Cache h^T (H, B_pad) in VMEM so phase 1 never re-reads x from HBM.
    cache_bytes = 4 * H * B_pad
    cache_h = (not force_no_cache) and (cache_bytes <= vmem_limit // 3)

    if cache_h:
        # Phase 1 pins the x block index to the last phase-0 block, so Pallas
        # issues no second HBM pass over tabular.
        x_index_map = lambda p, i: (i + p * (n_tiles - 1 - i), 0)
    else:
        x_index_map = lambda p, i: (i, 0)     # fallback: re-stream x in phase 1
        cost = pl.CostEstimate(flops=int(flops + 2 * B_pad * F * H),
                               transcendentals=int(H),
                               bytes_accessed=int(8 * B_pad * F + bytes_small))

    hcache_cols = B_pad if cache_h else 128   # tiny dummy when cache disabled

    out_t = pl.pallas_call(
        functools.partial(_mlp_tiled_kernel, inv_n=inv_n, tb=TB, cache_h=cache_h),
        out_shape=jax.ShapeDtypeStruct((out_f, B_pad), jnp.float32),
        grid_spec=pltpu.PrefetchScalarGridSpec(
            num_scalar_prefetch=0,
            grid=(2, n_tiles),                                   # (phase, batch tile)
            in_specs=[
                pl.BlockSpec((TB, F), x_index_map),              # tabular tile
                pl.BlockSpec((H, F), lambda p, i: (0, 0)),       # w1^T (resident)
                pl.BlockSpec((out_f, H), lambda p, i: (0, 0)),   # w2^T (resident)
                pl.BlockSpec((R, 4), lambda p, i: (0, 0)),       # packed params
            ],
            # Output is only produced in phase 1; phase-0 steps all map to
            # block 0 (zero-initialized in _init) so nothing stale is flushed.
            out_specs=pl.BlockSpec((out_f, TB), lambda p, i: (0, i * p)),
            scratch_shapes=[
                pltpu.VMEM((H, 1), jnp.float32),                 # running sum(h)
                pltpu.VMEM((H, 1), jnp.float32),                 # running sum(h*h)
                pltpu.VMEM((H, hcache_cols), jnp.float32),       # h cache (phase 0 -> 1)
            ],
        ),
        compiler_params=pltpu.CompilerParams(
            # Phase axis is sequential; batch-tile axis must also stay
            # "arbitrary" because BN stats are global over the whole batch.
            dimension_semantics=("arbitrary", "arbitrary"),
            vmem_limit_bytes=vmem_limit,
        ),
        cost_estimate=cost,
    )(tabular, w1t, w2t, packed)

    return out_t[:, :B].T   # (B, out_f)


def init_params(key, in_features, out_features, hidden=8):
    """Deterministic parameter init (PyTorch-style uniform bounds)."""
    k1, k2, k3, k4 = jax.random.split(key, 4)
    bound1 = 1.0 / jnp.sqrt(in_features)
    bound2 = 1.0 / jnp.sqrt(hidden)
    w1 = jax.random.uniform(k1, (in_features, hidden), jnp.float32, -bound1, bound1)
    b1 = jax.random.uniform(k2, (1, hidden), jnp.float32, -bound1, bound1)
    gamma = jnp.ones((1, hidden), jnp.float32)     # BatchNorm1d weight
    beta = jnp.zeros((1, hidden), jnp.float32)     # BatchNorm1d bias
    alpha = jnp.full((1, 1), 0.25, jnp.float32)    # PReLU default slope
    w2 = jax.random.uniform(k3, (hidden, out_features), jnp.float32, -bound2, bound2)
    b2 = jax.random.uniform(k4, (1, out_features), jnp.float32, -bound2, bound2)
    return dict(w1=w1, b1=b1, gamma=gamma, beta=beta, alpha=alpha, w2=w2, b2=b2)


def reference_forward(tabular, params):
    """Pure-JAX reference (faithful to PyTorch, including the Linear-1 bias)."""
    h = tabular @ params["w1"] + params["b1"]
    mean = jnp.mean(h, axis=0, keepdims=True)
    var = jnp.mean((h - mean) ** 2, axis=0, keepdims=True)
    h = (h - mean) / jnp.sqrt(var + BN_EPS) * params["gamma"] + params["beta"]
    h = jnp.where(h > 0, h, params["alpha"][0, 0] * h)
    return h @ params["w2"] + params["b2"]


if __name__ == "__main__":
    key = jax.random.PRNGKey(0)
    k_img, k_tab, k_par, k_tab2 = jax.random.split(key, 4)

    # mlp_layers_shapes = [16, ..., 4]
    in_features, out_features = 16, 4
    params = init_params(k_par, in_features, out_features)

    # 1) Harness-sized case (B=8): single-tile single-phase fast path.
    batch = 8
    image = jax.random.normal(k_img, (batch, 4, 16, 16), jnp.float32)   # unused
    tabular = jax.random.normal(k_tab, (batch, in_features), jnp.float32)
    out = jax.block_until_ready(mlp_8_bn_prl_forward(image, tabular, params))
    ref = reference_forward(tabular, params)
    assert out.shape == (batch, out_features)
    assert jnp.allclose(out, ref, atol=2e-4, rtol=2e-4)

    # 2) Tiled path: ragged batch padded to a tile multiple, in-VMEM h cache
    #    (x is streamed from HBM exactly once).
    batch2 = 300
    tabular2 = jax.random.normal(k_tab2, (batch2, in_features), jnp.float32)
    out2 = jax.block_until_ready(
        mlp_8_bn_prl_forward(None, tabular2, params, max_tb=128))
    ref2 = reference_forward(tabular2, params)
    assert out2.shape == (batch2, out_features)
    assert jnp.allclose(out2, ref2, atol=2e-4, rtol=2e-4)

    # 3) Same shapes, forced two-pass fallback (h cache disabled).
    out3 = jax.block_until_ready(
        mlp_8_bn_prl_forward(None, tabular2, params, max_tb=128,
                             force_no_cache=True))
    assert jnp.allclose(out3, ref2, atol=2e-4, rtol=2e-4)

    print("KERNEL_OK")
</pallas_src>

<mosaic_0001>
module attributes {stable_mosaic.version = 11 : i64} {
  func.func @_mlp_single_kernel(%arg0: memref<8x16xf32, #tpu.memory_space<vmem>>, %arg1: memref<8x16xf32, #tpu.memory_space<vmem>>, %arg2: memref<4x8xf32, #tpu.memory_space<vmem>>, %arg3: memref<8x4xf32, #tpu.memory_space<vmem>>, %arg4: memref<4x8xf32, #tpu.memory_space<vmem>>) attributes {dimension_semantics = [], scalar_prefetch = 0 : i64, scratch_operands = 0 : i64, tpu.core_type = #tpu.core_type<tc>} {
    %c0 = arith.constant 0 : index
    %c0_0 = arith.constant 0 : index
    %0 = vector.load %arg0[%c0, %c0_0] : memref<8x16xf32, #tpu.memory_space<vmem>>, vector<8x16xf32>
    %c0_1 = arith.constant 0 : index
    %c0_2 = arith.constant 0 : index
    %1 = vector.load %arg1[%c0_1, %c0_2] : memref<8x16xf32, #tpu.memory_space<vmem>>, vector<8x16xf32>
    %cst = arith.constant dense<0.000000e+00> : vector<8x8xf32>
    %2 = tpu.matmul %1, %0, %cst {dimension_numbers = #tpu.dot_dimension_numbers<[1], [1], [0], [0], [0, 0, 1, 0], [], []>} : vector<8x16xf32>, vector<8x16xf32>, vector<8x8xf32> -> vector<8x8xf32>
    %cst_3 = arith.constant dense<0.000000e+00> : vector<8xf32>
    %3 = vector.multi_reduction <add>, %2, %cst_3 [1] : vector<8x8xf32> to vector<8xf32>
    %4 = vector.shape_cast %3 : vector<8xf32> to vector<8x1xf32>
    %5 = arith.mulf %2, %2 : vector<8x8xf32>
    %cst_4 = arith.constant dense<0.000000e+00> : vector<8xf32>
    %6 = vector.multi_reduction <add>, %5, %cst_4 [1] : vector<8x8xf32> to vector<8xf32>
    %7 = vector.shape_cast %6 : vector<8xf32> to vector<8x1xf32>
    %c0_5 = arith.constant 0 : index
    %c0_6 = arith.constant 0 : index
    %8 = vector.load %arg3[%c0_5, %c0_6] : memref<8x4xf32, #tpu.memory_space<vmem>>, vector<8x4xf32>
    %cst_7 = arith.constant 1.250000e-01 : f32
    %9 = vector.broadcast %cst_7 : f32 to vector<8x1xf32>
    %10 = arith.mulf %4, %9 : vector<8x1xf32>
    %cst_8 = arith.constant 1.250000e-01 : f32
    %11 = vector.broadcast %cst_8 : f32 to vector<8x1xf32>
    %12 = arith.mulf %7, %11 : vector<8x1xf32>
    %13 = arith.mulf %10, %10 : vector<8x1xf32>
    %14 = arith.subf %12, %13 : vector<8x1xf32>
    %15 = vector.extract_strided_slice %8 {offsets = [0, 0], sizes = [8, 1], strides = [1, 1]} : vector<8x4xf32> to vector<8x1xf32>
    %16 = vector.extract_strided_slice %8 {offsets = [0, 1], sizes = [8, 1], strides = [1, 1]} : vector<8x4xf32> to vector<8x1xf32>
    %17 = vector.extract_strided_slice %8 {offsets = [0, 2], sizes = [8, 1], strides = [1, 1]} : vector<8x4xf32> to vector<8x1xf32>
    %cst_9 = arith.constant 9.99999974E-6 : f32
    %18 = vector.broadcast %cst_9 : f32 to vector<8x1xf32>
    %19 = arith.addf %14, %18 : vector<8x1xf32>
    %20 = math.rsqrt %19 : vector<8x1xf32>
    %21 = arith.mulf %15, %20 : vector<8x1xf32>
    %22 = arith.mulf %10, %21 : vector<8x1xf32>
    %23 = arith.subf %16, %22 : vector<8x1xf32>
    %24 = vector.broadcast %21 : vector<8x1xf32> to vector<8x8xf32>
    %25 = arith.mulf %2, %24 : vector<8x8xf32>
    %26 = vector.broadcast %23 : vector<8x1xf32> to vector<8x8xf32>
    %27 = arith.addf %25, %26 : vector<8x8xf32>
    %cst_10 = arith.constant 0.000000e+00 : f32
    %28 = vector.broadcast %cst_10 : f32 to vector<8x8xf32>
    %29 = arith.cmpf ogt, %27, %28 : vector<8x8xf32>
    %30 = vector.broadcast %17 : vector<8x1xf32> to vector<8x8xf32>
    %31 = arith.mulf %30, %27 : vector<8x8xf32>
    %32 = arith.select %29, %27, %31 : vector<8x8xi1>, vector<8x8xf32>
    %c0_11 = arith.constant 0 : index
    %c0_12 = arith.constant 0 : index
    %33 = vector.load %arg2[%c0_11, %c0_12] : memref<4x8xf32, #tpu.memory_space<vmem>>, vector<4x8xf32>
    %cst_13 = arith.constant dense<0.000000e+00> : vector<4x8xf32>
    %34 = tpu.matmul %33, %32, %cst_13 {dimension_numbers = #tpu.dot_dimension_numbers<[1], [0], [0], [1], [0, 0, 1, 1], [], []>} : vector<4x8xf32>, vector<8x8xf32>, vector<4x8xf32> -> vector<4x8xf32>
    %35 = vector.extract_strided_slice %8 {offsets = [0, 3], sizes = [4, 1], strides = [1, 1]} : vector<8x4xf32> to vector<4x1xf32>
    %36 = vector.broadcast %35 : vector<4x1xf32> to vector<4x8xf32>
    %37 = arith.addf %34, %36 : vector<4x8xf32>
    %c0_14 = arith.constant 0 : index
    %c0_15 = arith.constant 0 : index
    %38 = vector.load %arg4[%c0_14, %c0_15] : memref<4x8xf32, #tpu.memory_space<vmem>>, vector<4x8xf32>
    tpu.vector_store %arg4[%c0_14, %c0_15], %37 {strides = array<i32>} : memref<4x8xf32, #tpu.memory_space<vmem>>, vector<4x8xf32>,
    return
  }
}

</mosaic_0001>

<llo_original>
// kernel: tpu_custom_call.1
$region0: #{tpu_custom_call.1}
  #allocation0 [shape = 'u32[]', space=smem, size = 0x4, offset = 0x4, fixed_abs, tag = 'smem constant byte address 0x4 - core index']
  #allocation1 [shape = 'u32[144,128]{1,0:T(1,128)}', space=vmem, size = 0x12000, scoped, tag = 'internal scratch']
  %s0 = inlined_call_operand.vmem [shape: f32[8,16], index: 0, kind: input, shape index: {}]
  %s1 = inlined_call_operand.hbm [shape: f32[8,16], index: 1, kind: input, shape index: {}]
  %s2 = inlined_call_operand.vmem [shape: f32[4,8], index: 2, kind: input, shape index: {}]
  %s3 = inlined_call_operand.vmem [shape: f32[8,4], index: 3, kind: input, shape index: {}]
  %s4 = inlined_call_operand.hbm [shape: f32[4,8], index: 4, kind: output, shape index: {}]
  %s5 = sld [smem:[#allocation0]]
  $region30: #{tpu_custom_call.1} parent=0
    _
  %s7 = ssub.s32 1, %s5
  %s8 = scalar_select 0, %s7, %s5
  $region1: #{tpu_custom_call.1} parent=0
    #allocation2 [shape = 'u8[4096]{0}', space=vmem, size = 0x1000, scoped, tag = 'input window, operand 1, single buffered']
    #allocation3 [shape = 's32[1]{0}', space=sflag, size = 0x4, scoped, tag = 'scoped memory for tpu_custom_call.1']
    #allocation4 [shape = 's32[1]{0}', space=sflag, size = 0x4, scoped, tag = 'scoped memory for tpu_custom_call.1']
    #allocation5 [shape = 'u8[2048]{0}', space=vmem, size = 0x800, scoped, tag = 'output window, operand 0, single buffered']
    %9 = vsyncpa [#allocation3], 0
    %10 = vsyncpa [#allocation4], 0
    // Predicated region
    $region2: #{tpu_custom_call.1} parent=1 // pred_check
      _
    $region3: #{tpu_custom_call.1} parent=1 // pred_check_branch
      %12 = sbr.rel (0) target = $region5
    $region4: #{tpu_custom_call.1} parent=1 // pred_region
      _
    $region5: #{tpu_custom_call.1} parent=1 // pred_fallthru
      _
    // Predicated region
    $region6: #{tpu_custom_call.1} parent=1 // pred_check
      _
    $region7: #{tpu_custom_call.1} parent=1 // pred_check_branch
      %14 = sbr.rel (0) target = $region9
    $region8: #{tpu_custom_call.1} parent=1 // pred_region
      %s16 = ssub.s32 128, 128
      %17 = vsyncadd [#allocation3], %s16
      %s19 = sshll.u32 [#allocation2], 4
      %s20 = int_to_ptr.vmem [resolvable:$true] %s19
      %22 = dma.hbm_to_vmem [thread:$0]  %s1, 128, %s20, [#allocation3]
    $region9: #{tpu_custom_call.1} parent=1 // pred_fallthru
      _
    // Predicated region
    $region10: #{tpu_custom_call.1} parent=1 // pred_check
      _
    $region11: #{tpu_custom_call.1} parent=1 // pred_check_branch
      %24 = sbr.rel (0) target = $region13
    $region12: #{tpu_custom_call.1} parent=1 // pred_region
      _
    $region13: #{tpu_custom_call.1} parent=1 // pred_fallthru
      _
    // Predicated region
    $region14: #{tpu_custom_call.1} parent=1 // pred_check
      _
    $region15: #{tpu_custom_call.1} parent=1 // pred_check_branch
      %26 = sbr.rel (0) target = $region17
    $region16: #{tpu_custom_call.1} parent=1 // pred_region
      _
    $region17: #{tpu_custom_call.1} parent=1 // pred_fallthru
      _
    // Predicated region
    $region18: #{tpu_custom_call.1} parent=1 // pred_check
      _
    $region19: #{tpu_custom_call.1} parent=1 // pred_check_branch
      %28 = sbr.rel (0) target = $region21
    $region20: #{tpu_custom_call.1} parent=1 // pred_region
      %29 = dma.done [#allocation3], 128
    $region21: #{tpu_custom_call.1} parent=1 // pred_fallthru
      _
    %v30 = vld [vmem:[%s0] sm:$0xff]
    %v31 = vld [vmem:[#allocation2] sm:$0xff]
    %vm32 = vcmask 130048
    %v34 = vsel %vm32, %v31, 0
    %v37 = vsel %vm32, %v30, 0
    %39 = vmatprep.subr.mxu0 0.0
    %40 = vmatpush1.xpose.msra.mxu0 0.0
    %41 = vmatprep.subr.mxu0 0.0
    %42 = vmatpush1.xpose.msra.mxu0 0.0
    %43 = vmatprep.subr.mxu0 0.0
    %44 = vmatpush1.xpose.msra.mxu0 0.0
    %45 = vmatprep.subr.mxu0 0.0
    %46 = vmatpush1.xpose.msra.mxu0 0.0
    %47 = vmatprep.subr.mxu0 0.0
    %48 = vmatpush1.xpose.msra.mxu0 0.0
    %49 = vmatprep.subr.mxu0 0.0
    %50 = vmatpush1.xpose.msra.mxu0 0.0
    %51 = vmatprep.subr.mxu0 0.0
    %52 = vmatpush1.xpose.msra.mxu0 0.0
    %53 = vmatprep.subr.mxu0 0.0
    %54 = vmatpush1.xpose.msra.mxu0 0.0
    %55 = vmatprep.subr.mxu0 0.0
    %56 = vmatpush1.xpose.msra.mxu0 0.0
    %57 = vmatprep.subr.mxu0 0.0
    %58 = vmatpush1.xpose.msra.mxu0 0.0
    %59 = vmatprep.subr.mxu0 0.0
    %60 = vmatpush1.xpose.msra.mxu0 0.0
    %61 = vmatprep.subr.mxu0 0.0
    %62 = vmatpush1.xpose.msra.mxu0 0.0
    %63 = vmatprep.subr.mxu0 0.0
    %64 = vmatpush1.xpose.msra.mxu0 0.0
    %65 = vmatprep.subr.mxu0 0.0
    %66 = vmatpush1.xpose.msra.mxu0 0.0
    %67 = vmatprep.subr.mxu0 0.0
    %68 = vmatpush1.xpose.msra.mxu0 0.0
    %69 = vmatprep.subr.mxu0 0.0
    %70 = vmatpush1.xpose.msra.mxu0 %v37
    %71 = vmatprep.subr.mxu0 0.0
    %72 = vmatpush2.xpose.msra.mxu0 0.0
    %73 = vmatprep.subr.mxu0 0.0
    %74 = vmatpush2.xpose.msra.mxu0 0.0
    %75 = vmatprep.subr.mxu0 0.0
    %76 = vmatpush2.xpose.msra.mxu0 0.0
    %77 = vmatprep.subr.mxu0 0.0
    %78 = vmatpush2.xpose.msra.mxu0 0.0
    %79 = vmatprep.subr.mxu0 0.0
    %80 = vmatpush2.xpose.msra.mxu0 0.0
    %81 = vmatprep.subr.mxu0 0.0
    %82 = vmatpush2.xpose.msra.mxu0 0.0
    %83 = vmatprep.subr.mxu0 0.0
    %84 = vmatpush2.xpose.msra.mxu0 0.0
    %85 = vmatprep.subr.mxu0 0.0
    %86 = vmatpush2.xpose.msra.mxu0 0.0
    %87 = vmatprep.subr.mxu0 0.0
    %88 = vmatpush2.xpose.msra.mxu0 0.0
    %89 = vmatprep.subr.mxu0 0.0
    %90 = vmatpush2.xpose.msra.mxu0 0.0
    %91 = vmatprep.subr.mxu0 0.0
    %92 = vmatpush2.xpose.msra.mxu0 0.0
    %93 = vmatprep.subr.mxu0 0.0
    %94 = vmatpush2.xpose.msra.mxu0 0.0
    %95 = vmatprep.subr.mxu0 0.0
    %96 = vmatpush2.xpose.msra.mxu0 0.0
    %97 = vmatprep.subr.mxu0 0.0
    %98 = vmatpush2.xpose.msra.mxu0 0.0
    %99 = vmatprep.subr.mxu0 0.0
    %100 = vmatpush2.xpose.msra.mxu0 0.0
    %101 = vmatprep.subr.mxu0 0.0
    %102 = vmatpush2.xpose.msra.mxu0 0.0
    %103 = vmatprep.mubr.f32.mxu0 0.0
    %104 = vmatmul.mubr.f32.gmra.mxu0 %v34
    %v105 = vpop.f32.mrf.mxu0
    %v106 = vadd.f32 0.0, %v105
    %v107 = vpop.f32.mrf.mxu0
    %108 = vdwg.mxu0
    %vm109 = vcmask 64512
    %v110 = vsel %vm109, %v106, 0.0
    %111 = vadd.xlane.f32.xlu0 %v110
    %v112 = vpop.xlane.xlu0 %111
    %v113 = vmul.f32 %v106, %v106
    %v114 = vsel %vm109, %v113, 0.0
    %115 = vadd.xlane.f32.xlu0 %v114
    %v116 = vpop.xlane.xlu0 %115
    %v117 = vld [vmem:[%s3] sm:$0xff]
    %v118 = vmul.f32 %v112, 0.125
    %v119 = vmul.f32 %v116, 0.125
    %v120 = vmul.f32 %v118, %v118
    %v121 = vsub.f32 %v119, %v120
    %v122 = vadd.f32 %v121, 1e-05
    %v123 = vrsqrt.pop %v122
    %v124 = vmul.f32 %v117, %v123
    %v125 = vmul.f32 %v118, %v124
    %127 = vrot.lane.b32.xlu0 %v125, 1
    %v128 = vpop.permute.xlu0 %127
    %v130 = vsub.f32 %v117, %v128
    %132 = vset.pattern.permute.xlu0 0
    %133 = vperm.xlu0 %132, %v124
    %v134 = vpop.permute.xlu0 %133
    %v136 = vmul.f32 %v106, %v134
    %138 = vset.pattern.permute.xlu0 1
    %139 = vperm.xlu0 %138, %v130
    %v140 = vpop.permute.xlu0 %139
    %v142 = vadd.f32 %v136, %v140
    %vm143 = vcmp.gt.f32.partialorder %v142, 0.0
    %145 = vset.pattern.permute.xlu0 2
    %146 = vperm.xlu0 %145, %v117
    %v147 = vpop.permute.xlu0 %146
    %v149 = vmul.f32 %v147, %v142
    %v150 = vsel %vm143, %v142, %v149
    %v151 = vld [vmem:[%s2] sm:$0xf]
    %152 = vset.pattern.permute.xlu0 3
    %153 = vperm.xlu0 %152, %v117
    %v154 = vpop.permute.xlu0 %153
    %v157 = vsel %vm109, %v151, 0
    %159 = vmatprep.subr.mxu0 0.0
    %160 = vmatpush1.msra.mxu0 0.0
    %161 = vmatprep.subr.mxu0 0.0
    %162 = vmatpush1.msra.mxu0 0.0
    %163 = vmatprep.subr.mxu0 0.0
    %164 = vmatpush1.msra.mxu0 0.0
    %165 = vmatprep.subr.mxu0 0.0
    %166 = vmatpush1.msra.mxu0 0.0
    %167 = vmatprep.subr.mxu0 0.0
    %168 = vmatpush1.msra.mxu0 0.0
    %169 = vmatprep.subr.mxu0 0.0
    %170 = vmatpush1.msra.mxu0 0.0
    %171 = vmatprep.subr.mxu0 0.0
    %172 = vmatpush1.msra.mxu0 0.0
    %173 = vmatprep.subr.mxu0 0.0
    %174 = vmatpush1.msra.mxu0 0.0
    %175 = vmatprep.subr.mxu0 0.0
    %176 = vmatpush1.msra.mxu0 0.0
    %177 = vmatprep.subr.mxu0 0.0
    %178 = vmatpush1.msra.mxu0 0.0
    %179 = vmatprep.subr.mxu0 0.0
    %180 = vmatpush1.msra.mxu0 0.0
    %181 = vmatprep.subr.mxu0 0.0
    %182 = vmatpush1.msra.mxu0 0.0
    %183 = vmatprep.subr.mxu0 0.0
    %184 = vmatpush1.msra.mxu0 0.0
    %185 = vmatprep.subr.mxu0 0.0
    %186 = vmatpush1.msra.mxu0 0.0
    %187 = vmatprep.subr.mxu0 0.0
    %188 = vmatpush1.msra.mxu0 0.0
    %189 = vmatprep.subr.mxu0 0.0
    %190 = vmatpush1.msra.mxu0 %v150
    %191 = vmatprep.subr.mxu0 0.0
    %192 = vmatpush2.msra.mxu0 0.0
    %193 = vmatprep.subr.mxu0 0.0
    %194 = vmatpush2.msra.mxu0 0.0
    %195 = vmatprep.subr.mxu0 0.0
    %196 = vmatpush2.msra.mxu0 0.0
    %197 = vmatprep.subr.mxu0 0.0
    %198 = vmatpush2.msra.mxu0 0.0
    %199 = vmatprep.subr.mxu0 0.0
    %200 = vmatpush2.msra.mxu0 0.0
    %201 = vmatprep.subr.mxu0 0.0
    %202 = vmatpush2.msra.mxu0 0.0
    %203 = vmatprep.subr.mxu0 0.0
    %204 = vmatpush2.msra.mxu0 0.0
    %205 = vmatprep.subr.mxu0 0.0
    %206 = vmatpush2.msra.mxu0 0.0
    %207 = vmatprep.subr.mxu0 0.0
    %208 = vmatpush2.msra.mxu0 0.0
    %209 = vmatprep.subr.mxu0 0.0
    %210 = vmatpush2.msra.mxu0 0.0
    %211 = vmatprep.subr.mxu0 0.0
    %212 = vmatpush2.msra.mxu0 0.0
    %213 = vmatprep.subr.mxu0 0.0
    %214 = vmatpush2.msra.mxu0 0.0
    %215 = vmatprep.subr.mxu0 0.0
    %216 = vmatpush2.msra.mxu0 0.0
    %217 = vmatprep.subr.mxu0 0.0
    %218 = vmatpush2.msra.mxu0 0.0
    %219 = vmatprep.subr.mxu0 0.0
    %220 = vmatpush2.msra.mxu0 0.0
    %221 = vmatprep.subr.mxu0 0.0
    %222 = vmatpush2.msra.mxu0 0.0
    %223 = vmatprep.mubr.f32.mxu0 0.0
    %224 = vmatmul.mubr.f32.gmra.mxu0 %v157
    %v225 = vpop.f32.mrf.mxu0
    %v226 = vadd.f32 %v154, %v225
    %v227 = vpop.f32.mrf.mxu0
    %228 = vdwg.mxu0
    %vm229 = vcmask 60416
    %230 = vst.msk [vmem:[#allocation5] sm:$0xf] %vm229, %v226
    // Predicated region
    $region22: #{tpu_custom_call.1} parent=1 // pred_check
      _
    $region23: #{tpu_custom_call.1} parent=1 // pred_check_branch
      %232 = sbr.rel (0) target = $region25
    $region24: #{tpu_custom_call.1} parent=1 // pred_region
      %s234 = ssub.s32 64, 64
      %235 = vsyncadd [#allocation4], %s234
      %s237 = sshll.u32 [#allocation5], 4
      %s238 = int_to_ptr.vmem [resolvable:$true] %s237
      %240 = dma.vmem_to_hbm [thread:$0]  %s238, 64, %s4, [#allocation4]
    $region25: #{tpu_custom_call.1} parent=1 // pred_fallthru
      _
    // Predicated region
    $region26: #{tpu_custom_call.1} parent=1 // pred_check
      _
    $region27: #{tpu_custom_call.1} parent=1 // pred_check_branch
      %242 = sbr.rel (0) target = $region29
    $region28: #{tpu_custom_call.1} parent=1 // pred_region
      %243 = dma.done [#allocation4], 64
    $region29: #{tpu_custom_call.1} parent=1 // pred_fallthru
      _
    %244 = vsyncpa [#allocation3], 1
    %245 = vsyncpa [#allocation4], 1

</llo_original>
